<compile_context>
chip_gen: v6e
topology: v6e:2x2x1
jax: 0.10.0
libtpu: 0.0.40
codegen_flags: <defaults>
</compile_context>

<pallas_src>
import functools

import jax
import jax.numpy as jnp
import numpy as np
from jax import lax
from jax.experimental import pallas as pl
from jax.experimental.pallas import tpu as pltpu

OUT_LANES = 128  # lane-dense output width (assumes hidden < 128)


# ----------------------------------------------------------------------------- kernel
def actor_kernel(d_ref, p_ref, out_ref, *, f_pad, n_pad, hidden, amplitude, mean):
    f32 = jnp.float32
    H = hidden

    # Per-call activation slab: rows [0, n_pad) = X_pad, rows [n_pad, 2*n_pad) = M_norm.
    X_in = d_ref[0:n_pad, 0:f_pad]              # (n_pad, f_pad)  zero-padded features
    M = d_ref[n_pad:2 * n_pad, 0:n_pad]         # (n_pad, n_pad)  pre-normalized adjacency

    # Static slices into the packed parameter slab (weight rows, then bias rows). Free.
    w1   = p_ref[0:f_pad, :]
    w2   = p_ref[f_pad + 0 * H:f_pad + 1 * H, :]
    wg   = p_ref[f_pad + 1 * H:f_pad + 2 * H, :]
    wgd  = p_ref[f_pad + 2 * H:f_pad + 3 * H, :]
    wp1a = p_ref[f_pad + 3 * H:f_pad + 4 * H, :]
    wp1b = p_ref[f_pad + 4 * H:f_pad + 5 * H, :]
    wp2  = p_ref[f_pad + 5 * H:f_pad + 6 * H, :]
    wpi  = p_ref[f_pad + 6 * H:f_pad + 7 * H, :]   # zero-padded to (H, H)

    boff = f_pad + 7 * H
    b1  = p_ref[boff + 0:boff + 1, :]
    b2  = p_ref[boff + 1:boff + 2, :]
    bg  = p_ref[boff + 2:boff + 3, :]
    bgd = p_ref[boff + 3:boff + 4, :]
    bp1 = p_ref[boff + 4:boff + 5, :]
    bp2 = p_ref[boff + 5:boff + 6, :]
    bpi = p_ref[boff + 6:boff + 7, :]              # zero-padded to (1, H)

    relu = lambda v: jnp.maximum(v, 0.0)
    dot = lambda a, b: jnp.dot(a, b, preferred_element_type=f32)

    # encoder_1 -> relu -> encoder_2 -> relu
    X = relu(dot(X_in, w1) + b1)
    X = relu(dot(X, w2) + b2)                            # (n_pad, H)

    # GCNConv (symmetric normalization hoisted to the wrapper), then GraphConv_Dense.
    Xg = relu(dot(M, dot(X, wg)) + bg)
    Xg = relu(dot(Xg, wgd) + bgd)

    # policy_1 over cat([Xg, X], dim=1): split (64,32) weight into two (32,32) dots.
    Xp = relu(dot(Xg, wp1a) + dot(X, wp1b) + bp1)
    Xp = relu(dot(Xp, wp2) + bp2)

    # pi head + bounded action, computed at full H lanes (padded columns -> tanh(0)).
    pi = dot(Xp, wpi) + bpi
    action = amplitude * jnp.tanh(pi) + mean             # (n_pad, H)

    # Lane-dense (n_pad, 128) store: pad with zeros along lanes -> unmasked, aligned vst.
    out_ref[...] = jnp.concatenate(
        [action, jnp.zeros((n_pad, OUT_LANES - H), f32)], axis=1)


# ----------------------------------------------------------------------------- packing (ONCE at init)
def pack_actor_params(params, feat_dim, hidden):
    """Pack all 15 parameter arrays into one (f_pad + 7H + 8, H) f32 slab."""
    H = hidden
    f_pad = int(-(-feat_dim // 8) * 8)
    act_dim = params["wpi"].shape[1]
    w1_pad = jnp.pad(params["w1"].astype(jnp.float32), ((0, f_pad - feat_dim), (0, 0)))
    wpi_pad = jnp.pad(params["wpi"], ((0, 0), (0, H - act_dim)))
    bpi_pad = jnp.pad(params["bpi"], ((0, 0), (0, H - act_dim)))
    slab = jnp.concatenate(
        [w1_pad, params["w2"], params["wg"], params["wgd"],
         params["wp1a"], params["wp1b"], params["wp2"], wpi_pad,
         params["b1"], params["b2"], params["bg"], params["bgd"],
         params["bp1"], params["bp2"], bpi_pad,
         jnp.zeros((1, H), jnp.float32)], axis=0).astype(jnp.float32)
    return slab, f_pad


# ----------------------------------------------------------------------------- per-step forward
def graph_actor_forward(X_in, A_dense, param_slab, *,
                        feat_dim, n_agents, f_pad, hidden, act_dim,
                        action_min, action_max):
    H = hidden
    N = n_agents
    n_pad = int(-(-N // 8) * 8)
    data_w = max(f_pad, n_pad)
    amplitude = float(0.5 * (action_max - action_min))
    mean = float(0.5 * (action_max + action_min))

    # Hoisted GCN normalization (depends only on A; fuses in XLA outside the kernel):
    #   M_norm = D^{-1/2} (binarize(A)^T + I) D^{-1/2}
    a_bin = (A_dense != 0.0).astype(jnp.float32)
    m = a_bin.T + jnp.eye(N, dtype=jnp.float32)          # zero-diagonal adjacency assumed
    d_inv_sqrt = lax.rsqrt(jnp.sum(m, axis=-1, keepdims=True))
    m_norm = d_inv_sqrt * m * d_inv_sqrt.T               # (N, N)

    # One per-call activation slab: [X_pad ; M_norm] stacked along sublanes -> single DMA.
    x_blk = jnp.zeros((n_pad, data_w), jnp.float32).at[:N, :feat_dim].set(X_in)
    m_blk = jnp.zeros((n_pad, data_w), jnp.float32).at[:N, :N].set(m_norm)
    data = jnp.concatenate([x_blk, m_blk], axis=0)       # (2*n_pad, data_w)

    flops = 2 * n_pad * H * (f_pad + n_pad + 7 * H)
    bytes_accessed = 4 * (data.size + param_slab.size + n_pad * OUT_LANES)
    cost = pl.CostEstimate(flops=flops, transcendentals=n_pad * H,
                           bytes_accessed=bytes_accessed)

    vmem_spec = pl.BlockSpec(memory_space=pltpu.MemorySpace.VMEM)
    kernel = functools.partial(actor_kernel, f_pad=f_pad, n_pad=n_pad, hidden=H,
                               amplitude=amplitude, mean=mean)
    out = pl.pallas_call(
        kernel,
        out_shape=jax.ShapeDtypeStruct((n_pad, OUT_LANES), jnp.float32),
        in_specs=[vmem_spec, vmem_spec],
        out_specs=vmem_spec,
        cost_estimate=cost,
    )(data, param_slab)
    return out[:N, :act_dim]


# ----------------------------------------------------------------------------- params / reference
def _linear_params(key, fan_in, fan_out):
    k_w, k_b = jax.random.split(key)
    bound = 1.0 / np.sqrt(fan_in)
    w = jax.random.uniform(k_w, (fan_in, fan_out), jnp.float32, -bound, bound)
    b = jax.random.uniform(k_b, (1, fan_out), jnp.float32, -bound, bound)
    return w, b


def make_params(key, feat_dim, act_dim, hidden=32):
    ks = jax.random.split(key, 8)
    p = {}
    p["w1"], p["b1"] = _linear_params(ks[0], feat_dim, hidden)
    p["w2"], p["b2"] = _linear_params(ks[1], hidden, hidden)
    p["wg"], p["bg"] = _linear_params(ks[2], hidden, hidden)        # GCNConv weight / bias
    p["wgd"], p["bgd"] = _linear_params(ks[3], hidden, hidden)
    wp1, p["bp1"] = _linear_params(ks[4], 2 * hidden, hidden)        # policy_1 over concat (64 -> 32)
    p["wp1a"], p["wp1b"] = wp1[:hidden], wp1[hidden:]
    p["wp2"], p["bp2"] = _linear_params(ks[5], hidden, hidden)
    p["wpi"], p["bpi"] = _linear_params(ks[6], hidden, act_dim)
    return p


def reference_forward(X_in, A_dense, params, action_min, action_max):
    relu = lambda v: jnp.maximum(v, 0.0)
    X = relu(X_in @ params["w1"] + params["b1"])
    X = relu(X @ params["w2"] + params["b2"])
    N = A_dense.shape[0]
    m = (A_dense != 0.0).astype(jnp.float32).T + jnp.eye(N, dtype=jnp.float32)
    deg = m.sum(-1, keepdims=True)
    dis = 1.0 / jnp.sqrt(deg)
    Xg = dis * (m @ (dis * (X @ params["wg"]))) + params["bg"]
    Xg = relu(Xg)
    Xg = relu(Xg @ params["wgd"] + params["bgd"])
    Xp = relu(Xg @ params["wp1a"] + X @ params["wp1b"] + params["bp1"])
    Xp = relu(Xp @ params["wp2"] + params["bp2"])
    pi = Xp @ params["wpi"] + params["bpi"]
    amp = 0.5 * (action_max - action_min)
    mid = 0.5 * (action_max + action_min)
    return amp * jnp.tanh(pi) + mid


# ----------------------------------------------------------------------------- main
if __name__ == "__main__":
    N, FEAT, ACT = 8, 8, 2                 # vehicles, feature length, action dim
    HIDDEN = 32
    action_min, action_max = -2.0, 1.0

    key = jax.random.PRNGKey(0)
    k_x, k_a, k_p = jax.random.split(key, 3)

    X_in = jax.random.normal(k_x, (N, FEAT), dtype=jnp.float32)
    # Random symmetric binary adjacency with zero diagonal (GCNConv adds self loops itself).
    a_raw = (jax.random.uniform(k_a, (N, N)) > 0.6).astype(jnp.float32)
    A_dense = jnp.clip(a_raw + a_raw.T, 0.0, 1.0) * (1.0 - jnp.eye(N, dtype=jnp.float32))
    RL_indice = jnp.ones((N,), dtype=jnp.float32)   # mask: converted but unused by the actor forward

    params = make_params(k_p, FEAT, ACT, hidden=HIDDEN)

    # One-time parameter packing (hoisted out of the per-step path).
    param_slab, f_pad = pack_actor_params(params, FEAT, HIDDEN)
    param_slab = jax.block_until_ready(param_slab)

    fwd = jax.jit(functools.partial(
        graph_actor_forward, feat_dim=FEAT, n_agents=N, f_pad=f_pad, hidden=HIDDEN,
        act_dim=ACT, action_min=action_min, action_max=action_max))

    action = jax.block_until_ready(fwd(X_in, A_dense, param_slab))

    expected = reference_forward(X_in, A_dense, params, action_min, action_max)
    np.testing.assert_allclose(np.asarray(action), np.asarray(expected), rtol=1e-5, atol=1e-5)

    print("KERNEL_OK")
</pallas_src>

<mosaic_0001>
module attributes {stable_mosaic.version = 11 : i64} {
  func.func @actor_kernel(%arg0: memref<16x8xf32, #tpu.memory_space<vmem>>, %arg1: memref<240x32xf32, #tpu.memory_space<vmem>>, %arg2: memref<8x128xf32, #tpu.memory_space<vmem>>) attributes {dimension_semantics = [], scalar_prefetch = 0 : i64, scratch_operands = 0 : i64, tpu.core_type = #tpu.core_type<tc>} {
    %c0 = arith.constant 0 : index
    %c0_0 = arith.constant 0 : index
    %0 = vector.load %arg0[%c0, %c0_0] : memref<16x8xf32, #tpu.memory_space<vmem>>, vector<8x8xf32>
    %c8 = arith.constant 8 : index
    %c0_1 = arith.constant 0 : index
    %1 = vector.load %arg0[%c8, %c0_1] : memref<16x8xf32, #tpu.memory_space<vmem>>, vector<8x8xf32>
    %c0_2 = arith.constant 0 : index
    %c0_3 = arith.constant 0 : index
    %2 = vector.load %arg1[%c0_2, %c0_3] : memref<240x32xf32, #tpu.memory_space<vmem>>, vector<8x32xf32>
    %c8_4 = arith.constant 8 : index
    %c0_5 = arith.constant 0 : index
    %3 = vector.load %arg1[%c8_4, %c0_5] : memref<240x32xf32, #tpu.memory_space<vmem>>, vector<32x32xf32>
    %c40 = arith.constant 40 : index
    %c0_6 = arith.constant 0 : index
    %4 = vector.load %arg1[%c40, %c0_6] : memref<240x32xf32, #tpu.memory_space<vmem>>, vector<32x32xf32>
    %c72 = arith.constant 72 : index
    %c0_7 = arith.constant 0 : index
    %5 = vector.load %arg1[%c72, %c0_7] : memref<240x32xf32, #tpu.memory_space<vmem>>, vector<32x32xf32>
    %c104 = arith.constant 104 : index
    %c0_8 = arith.constant 0 : index
    %6 = vector.load %arg1[%c104, %c0_8] : memref<240x32xf32, #tpu.memory_space<vmem>>, vector<32x32xf32>
    %c136 = arith.constant 136 : index
    %c0_9 = arith.constant 0 : index
    %7 = vector.load %arg1[%c136, %c0_9] : memref<240x32xf32, #tpu.memory_space<vmem>>, vector<32x32xf32>
    %c168 = arith.constant 168 : index
    %c0_10 = arith.constant 0 : index
    %8 = vector.load %arg1[%c168, %c0_10] : memref<240x32xf32, #tpu.memory_space<vmem>>, vector<32x32xf32>
    %c200 = arith.constant 200 : index
    %c0_11 = arith.constant 0 : index
    %9 = vector.load %arg1[%c200, %c0_11] : memref<240x32xf32, #tpu.memory_space<vmem>>, vector<32x32xf32>
    %c232 = arith.constant 232 : index
    %c0_12 = arith.constant 0 : index
    %10 = vector.load %arg1[%c232, %c0_12] : memref<240x32xf32, #tpu.memory_space<vmem>>, vector<1x32xf32>
    %c233 = arith.constant 233 : index
    %c0_13 = arith.constant 0 : index
    %11 = vector.load %arg1[%c233, %c0_13] : memref<240x32xf32, #tpu.memory_space<vmem>>, vector<1x32xf32>
    %c234 = arith.constant 234 : index
    %c0_14 = arith.constant 0 : index
    %12 = vector.load %arg1[%c234, %c0_14] : memref<240x32xf32, #tpu.memory_space<vmem>>, vector<1x32xf32>
    %c235 = arith.constant 235 : index
    %c0_15 = arith.constant 0 : index
    %13 = vector.load %arg1[%c235, %c0_15] : memref<240x32xf32, #tpu.memory_space<vmem>>, vector<1x32xf32>
    %c236 = arith.constant 236 : index
    %c0_16 = arith.constant 0 : index
    %14 = vector.load %arg1[%c236, %c0_16] : memref<240x32xf32, #tpu.memory_space<vmem>>, vector<1x32xf32>
    %c237 = arith.constant 237 : index
    %c0_17 = arith.constant 0 : index
    %15 = vector.load %arg1[%c237, %c0_17] : memref<240x32xf32, #tpu.memory_space<vmem>>, vector<1x32xf32>
    %c238 = arith.constant 238 : index
    %c0_18 = arith.constant 0 : index
    %16 = vector.load %arg1[%c238, %c0_18] : memref<240x32xf32, #tpu.memory_space<vmem>>, vector<1x32xf32>
    %cst = arith.constant dense<0.000000e+00> : vector<8x32xf32>
    %17 = tpu.matmul %0, %2, %cst {dimension_numbers = #tpu.dot_dimension_numbers<[1], [0], [0], [1], [0, 0, 1, 1], [], []>} : vector<8x8xf32>, vector<8x32xf32>, vector<8x32xf32> -> vector<8x32xf32>
    %18 = vector.broadcast %10 : vector<1x32xf32> to vector<8x32xf32>
    %19 = arith.addf %17, %18 : vector<8x32xf32>
    %cst_19 = arith.constant 0.000000e+00 : f32
    %20 = vector.broadcast %cst_19 : f32 to vector<8x32xf32>
    %21 = arith.maximumf %19, %20 : vector<8x32xf32>
    %cst_20 = arith.constant dense<0.000000e+00> : vector<8x32xf32>
    %22 = tpu.matmul %21, %3, %cst_20 {dimension_numbers = #tpu.dot_dimension_numbers<[1], [0], [0], [1], [0, 0, 1, 1], [], []>} : vector<8x32xf32>, vector<32x32xf32>, vector<8x32xf32> -> vector<8x32xf32>
    %23 = vector.broadcast %11 : vector<1x32xf32> to vector<8x32xf32>
    %24 = arith.addf %22, %23 : vector<8x32xf32>
    %cst_21 = arith.constant 0.000000e+00 : f32
    %25 = vector.broadcast %cst_21 : f32 to vector<8x32xf32>
    %26 = arith.maximumf %24, %25 : vector<8x32xf32>
    %cst_22 = arith.constant dense<0.000000e+00> : vector<8x32xf32>
    %27 = tpu.matmul %26, %4, %cst_22 {dimension_numbers = #tpu.dot_dimension_numbers<[1], [0], [0], [1], [0, 0, 1, 1], [], []>} : vector<8x32xf32>, vector<32x32xf32>, vector<8x32xf32> -> vector<8x32xf32>
    %cst_23 = arith.constant dense<0.000000e+00> : vector<8x32xf32>
    %28 = tpu.matmul %1, %27, %cst_23 {dimension_numbers = #tpu.dot_dimension_numbers<[1], [0], [0], [1], [0, 0, 1, 1], [], []>} : vector<8x8xf32>, vector<8x32xf32>, vector<8x32xf32> -> vector<8x32xf32>
    %29 = vector.broadcast %12 : vector<1x32xf32> to vector<8x32xf32>
    %30 = arith.addf %28, %29 : vector<8x32xf32>
    %cst_24 = arith.constant 0.000000e+00 : f32
    %31 = vector.broadcast %cst_24 : f32 to vector<8x32xf32>
    %32 = arith.maximumf %30, %31 : vector<8x32xf32>
    %cst_25 = arith.constant dense<0.000000e+00> : vector<8x32xf32>
    %33 = tpu.matmul %32, %5, %cst_25 {dimension_numbers = #tpu.dot_dimension_numbers<[1], [0], [0], [1], [0, 0, 1, 1], [], []>} : vector<8x32xf32>, vector<32x32xf32>, vector<8x32xf32> -> vector<8x32xf32>
    %34 = vector.broadcast %13 : vector<1x32xf32> to vector<8x32xf32>
    %35 = arith.addf %33, %34 : vector<8x32xf32>
    %cst_26 = arith.constant 0.000000e+00 : f32
    %36 = vector.broadcast %cst_26 : f32 to vector<8x32xf32>
    %37 = arith.maximumf %35, %36 : vector<8x32xf32>
    %cst_27 = arith.constant dense<0.000000e+00> : vector<8x32xf32>
    %38 = tpu.matmul %37, %6, %cst_27 {dimension_numbers = #tpu.dot_dimension_numbers<[1], [0], [0], [1], [0, 0, 1, 1], [], []>} : vector<8x32xf32>, vector<32x32xf32>, vector<8x32xf32> -> vector<8x32xf32>
    %cst_28 = arith.constant dense<0.000000e+00> : vector<8x32xf32>
    %39 = tpu.matmul %26, %7, %cst_28 {dimension_numbers = #tpu.dot_dimension_numbers<[1], [0], [0], [1], [0, 0, 1, 1], [], []>} : vector<8x32xf32>, vector<32x32xf32>, vector<8x32xf32> -> vector<8x32xf32>
    %40 = arith.addf %38, %39 : vector<8x32xf32>
    %41 = vector.broadcast %14 : vector<1x32xf32> to vector<8x32xf32>
    %42 = arith.addf %40, %41 : vector<8x32xf32>
    %cst_29 = arith.constant 0.000000e+00 : f32
    %43 = vector.broadcast %cst_29 : f32 to vector<8x32xf32>
    %44 = arith.maximumf %42, %43 : vector<8x32xf32>
    %cst_30 = arith.constant dense<0.000000e+00> : vector<8x32xf32>
    %45 = tpu.matmul %44, %8, %cst_30 {dimension_numbers = #tpu.dot_dimension_numbers<[1], [0], [0], [1], [0, 0, 1, 1], [], []>} : vector<8x32xf32>, vector<32x32xf32>, vector<8x32xf32> -> vector<8x32xf32>
    %46 = vector.broadcast %15 : vector<1x32xf32> to vector<8x32xf32>
    %47 = arith.addf %45, %46 : vector<8x32xf32>
    %cst_31 = arith.constant 0.000000e+00 : f32
    %48 = vector.broadcast %cst_31 : f32 to vector<8x32xf32>
    %49 = arith.maximumf %47, %48 : vector<8x32xf32>
    %cst_32 = arith.constant dense<0.000000e+00> : vector<8x32xf32>
    %50 = tpu.matmul %49, %9, %cst_32 {dimension_numbers = #tpu.dot_dimension_numbers<[1], [0], [0], [1], [0, 0, 1, 1], [], []>} : vector<8x32xf32>, vector<32x32xf32>, vector<8x32xf32> -> vector<8x32xf32>
    %51 = vector.broadcast %16 : vector<1x32xf32> to vector<8x32xf32>
    %52 = arith.addf %50, %51 : vector<8x32xf32>
    %53 = math.tanh %52 : vector<8x32xf32>
    %cst_33 = arith.constant 1.500000e+00 : f32
    %54 = vector.broadcast %cst_33 : f32 to vector<8x32xf32>
    %55 = arith.mulf %54, %53 : vector<8x32xf32>
    %cst_34 = arith.constant -5.000000e-01 : f32
    %56 = vector.broadcast %cst_34 : f32 to vector<8x32xf32>
    %57 = arith.addf %55, %56 : vector<8x32xf32>
    %cst_35 = arith.constant 0.000000e+00 : f32
    %58 = vector.broadcast %cst_35 : f32 to vector<8x96xf32>
    %59 = tpu.concatenate %57, %58 in 1 : vector<8x32xf32>, vector<8x96xf32> -> vector<8x128xf32>
    %c0_36 = arith.constant 0 : index
    %c0_37 = arith.constant 0 : index
    %60 = vector.load %arg2[%c0_36, %c0_37] : memref<8x128xf32, #tpu.memory_space<vmem>>, vector<8x128xf32>
    tpu.vector_store %arg2[%c0_36, %c0_37], %59 {strides = array<i32>} : memref<8x128xf32, #tpu.memory_space<vmem>>, vector<8x128xf32>,
    return
  }
}

</mosaic_0001>

<llo_original>
// kernel: graph_actor_forward.1
$region0: #{graph_actor_forward.1}
  #allocation0 [shape = 'u32[]', space=smem, size = 0x4, offset = 0x4, fixed_abs, tag = 'smem constant byte address 0x4 - core index']
  #allocation1 [shape = 'u32[144,128]{1,0:T(1,128)}', space=vmem, size = 0x12000, scoped, tag = 'internal scratch']
  %s0 = inlined_call_operand.vmem [shape: f32[16,8], index: 0, kind: input, shape index: {}]
  %s1 = inlined_call_operand.vmem [shape: f32[240,32], index: 1, kind: input, shape index: {}]
  %s2 = inlined_call_operand.vmem [shape: f32[8,128], index: 2, kind: output, shape index: {}]
  %s3 = sld [smem:[#allocation0]]
  $region18: #{graph_actor_forward.1} parent=0
    _
  %s5 = ssub.s32 1, %s3
  %s6 = scalar_select 0, %s5, %s3
  // Predicated region
  $region2: #{graph_actor_forward.1} parent=0 // pred_check
    _
  $region3: #{graph_actor_forward.1} parent=0 // pred_check_branch
    %8 = sbr.rel (0) target = $region5
  $region4: #{graph_actor_forward.1} parent=0 // pred_region
    _
  $region5: #{graph_actor_forward.1} parent=0 // pred_fallthru
    _
  // Predicated region
  $region6: #{graph_actor_forward.1} parent=0 // pred_check
    _
  $region7: #{graph_actor_forward.1} parent=0 // pred_check_branch
    %10 = sbr.rel (0) target = $region9
  $region8: #{graph_actor_forward.1} parent=0 // pred_region
    _
  $region9: #{graph_actor_forward.1} parent=0 // pred_fallthru
    _
  %v11 = vld [vmem:[%s0] sm:$0xff]
  %v12 = vld [vmem:[%s0 + $0x8] sm:$0xff]
  %v13 = vld [vmem:[%s1] sm:$0xff]
  %v14 = vld [vmem:[%s1 + $0x8] sm:$0xff]
  %v15 = vld [vmem:[%s1 + $0x10] sm:$0xff]
  %v16 = vld [vmem:[%s1 + $0x18] sm:$0xff]
  %v17 = vld [vmem:[%s1 + $0x20] sm:$0xff]
  %v18 = vld [vmem:[%s1 + $0x28] sm:$0xff]
  %v19 = vld [vmem:[%s1 + $0x30] sm:$0xff]
  %v20 = vld [vmem:[%s1 + $0x38] sm:$0xff]
  %v21 = vld [vmem:[%s1 + $0x40] sm:$0xff]
  %v22 = vld [vmem:[%s1 + $0x48] sm:$0xff]
  %v23 = vld [vmem:[%s1 + $0x50] sm:$0xff]
  %v24 = vld [vmem:[%s1 + $0x58] sm:$0xff]
  %v25 = vld [vmem:[%s1 + $0x60] sm:$0xff]
  %v26 = vld [vmem:[%s1 + $0x68] sm:$0xff]
  %v27 = vld [vmem:[%s1 + $0x70] sm:$0xff]
  %v28 = vld [vmem:[%s1 + $0x78] sm:$0xff]
  %v29 = vld [vmem:[%s1 + $0x80] sm:$0xff]
  %v30 = vld [vmem:[%s1 + $0x88] sm:$0xff]
  %v31 = vld [vmem:[%s1 + $0x90] sm:$0xff]
  %v32 = vld [vmem:[%s1 + $0x98] sm:$0xff]
  %v33 = vld [vmem:[%s1 + $0xa0] sm:$0xff]
  %v34 = vld [vmem:[%s1 + $0xa8] sm:$0xff]
  %v35 = vld [vmem:[%s1 + $0xb0] sm:$0xff]
  %v36 = vld [vmem:[%s1 + $0xb8] sm:$0xff]
  %v37 = vld [vmem:[%s1 + $0xc0] sm:$0xff]
  %v38 = vld [vmem:[%s1 + $0xc8] sm:$0xff]
  %v39 = vld [vmem:[%s1 + $0xd0] sm:$0xff]
  %v40 = vld [vmem:[%s1 + $0xd8] sm:$0xff]
  %v41 = vld [vmem:[%s1 + $0xe0] sm:$0xff]
  %v42 = vld [vmem:[%s1 + $0xe8] sm:$0x1]
  %v43 = vld [vmem:[%s1 + $0xe9] sm:$0x1]
  %v44 = vld [vmem:[%s1 + $0xea] sm:$0x1]
  %v45 = vld [vmem:[%s1 + $0xeb] sm:$0x1]
  %v46 = vld [vmem:[%s1 + $0xec] sm:$0x1]
  %v47 = vld [vmem:[%s1 + $0xed] sm:$0x1]
  %v48 = vld [vmem:[%s1 + $0xee] sm:$0x1]
  %v49 = vlaneseq
  %v50 = vshrl.u32 %v49, 7
  %v51 = vsub.s32 0, %v50
  %v52 = vrot.slane %v42, %v51
  %vm53 = vcmask 64512
  %v55 = vsel %vm53, %v11, 0
  %57 = vmatprep.subr.mxu0 0.0
  %58 = vmatpush1.msra.mxu0 0.0
  %59 = vmatprep.subr.mxu0 0.0
  %60 = vmatpush1.msra.mxu0 0.0
  %61 = vmatprep.subr.mxu0 0.0
  %62 = vmatpush1.msra.mxu0 0.0
  %63 = vmatprep.subr.mxu0 0.0
  %64 = vmatpush1.msra.mxu0 0.0
  %65 = vmatprep.subr.mxu0 0.0
  %66 = vmatpush1.msra.mxu0 0.0
  %67 = vmatprep.subr.mxu0 0.0
  %68 = vmatpush1.msra.mxu0 0.0
  %69 = vmatprep.subr.mxu0 0.0
  %70 = vmatpush1.msra.mxu0 0.0
  %71 = vmatprep.subr.mxu0 0.0
  %72 = vmatpush1.msra.mxu0 0.0
  %73 = vmatprep.subr.mxu0 0.0
  %74 = vmatpush1.msra.mxu0 0.0
  %75 = vmatprep.subr.mxu0 0.0
  %76 = vmatpush1.msra.mxu0 0.0
  %77 = vmatprep.subr.mxu0 0.0
  %78 = vmatpush1.msra.mxu0 0.0
  %79 = vmatprep.subr.mxu0 0.0
  %80 = vmatpush1.msra.mxu0 0.0
  %81 = vmatprep.subr.mxu0 0.0
  %82 = vmatpush1.msra.mxu0 0.0
  %83 = vmatprep.subr.mxu0 0.0
  %84 = vmatpush1.msra.mxu0 0.0
  %85 = vmatprep.subr.mxu0 0.0
  %86 = vmatpush1.msra.mxu0 0.0
  %87 = vmatprep.subr.mxu0 0.0
  %88 = vmatpush1.msra.mxu0 %v13
  %89 = vmatprep.subr.mxu0 0.0
  %90 = vmatpush2.msra.mxu0 0.0
  %91 = vmatprep.subr.mxu0 0.0
  %92 = vmatpush2.msra.mxu0 0.0
  %93 = vmatprep.subr.mxu0 0.0
  %94 = vmatpush2.msra.mxu0 0.0
  %95 = vmatprep.subr.mxu0 0.0
  %96 = vmatpush2.msra.mxu0 0.0
  %97 = vmatprep.subr.mxu0 0.0
  %98 = vmatpush2.msra.mxu0 0.0
  %99 = vmatprep.subr.mxu0 0.0
  %100 = vmatpush2.msra.mxu0 0.0
  %101 = vmatprep.subr.mxu0 0.0
  %102 = vmatpush2.msra.mxu0 0.0
  %103 = vmatprep.subr.mxu0 0.0
  %104 = vmatpush2.msra.mxu0 0.0
  %105 = vmatprep.subr.mxu0 0.0
  %106 = vmatpush2.msra.mxu0 0.0
  %107 = vmatprep.subr.mxu0 0.0
  %108 = vmatpush2.msra.mxu0 0.0
  %109 = vmatprep.subr.mxu0 0.0
  %110 = vmatpush2.msra.mxu0 0.0
  %111 = vmatprep.subr.mxu0 0.0
  %112 = vmatpush2.msra.mxu0 0.0
  %113 = vmatprep.subr.mxu0 0.0
  %114 = vmatpush2.msra.mxu0 0.0
  %115 = vmatprep.subr.mxu0 0.0
  %116 = vmatpush2.msra.mxu0 0.0
  %117 = vmatprep.subr.mxu0 0.0
  %118 = vmatpush2.msra.mxu0 0.0
  %119 = vmatprep.subr.mxu0 0.0
  %120 = vmatpush2.msra.mxu0 0.0
  %121 = vmatprep.mubr.f32.mxu0 0.0
  %122 = vmatmul.mubr.f32.gmra.mxu0 %v55
  %v123 = vpop.f32.mrf.mxu0
  %v124 = vadd.f32 %v52, %v123
  %v125 = vpop.f32.mrf.mxu0
  %126 = vdwg.mxu0
  %v127 = vmax.f32 %v124, 0.0
  %v128 = vlaneseq
  %v129 = vshrl.u32 %v128, 7
  %v130 = vsub.s32 0, %v129
  %v131 = vrot.slane %v43, %v130
  %vm132 = vcmask 261120
  %v134 = vsel %vm132, %v127, 0
  %136 = vmatprep.subr.mxu0 0.0
  %137 = vmatpush1.msra.mxu0 0.0
  %138 = vmatprep.subr.mxu0 0.0
  %139 = vmatpush1.msra.mxu0 0.0
  %140 = vmatprep.subr.mxu0 0.0
  %141 = vmatpush1.msra.mxu0 0.0
  %142 = vmatprep.subr.mxu0 0.0
  %143 = vmatpush1.msra.mxu0 0.0
  %144 = vmatprep.subr.mxu0 0.0
  %145 = vmatpush1.msra.mxu0 0.0
  %146 = vmatprep.subr.mxu0 0.0
  %147 = vmatpush1.msra.mxu0 0.0
  %148 = vmatprep.subr.mxu0 0.0
  %149 = vmatpush1.msra.mxu0 0.0
  %150 = vmatprep.subr.mxu0 0.0
  %151 = vmatpush1.msra.mxu0 0.0
  %152 = vmatprep.subr.mxu0 0.0
  %153 = vmatpush1.msra.mxu0 0.0
  %154 = vmatprep.subr.mxu0 0.0
  %155 = vmatpush1.msra.mxu0 0.0
  %156 = vmatprep.subr.mxu0 0.0
  %157 = vmatpush1.msra.mxu0 0.0
  %158 = vmatprep.subr.mxu0 0.0
  %159 = vmatpush1.msra.mxu0 0.0
  %160 = vmatprep.subr.mxu0 0.0
  %161 = vmatpush1.msra.mxu0 %v17
  %162 = vmatprep.subr.mxu0 0.0
  %163 = vmatpush1.msra.mxu0 %v16
  %164 = vmatprep.subr.mxu0 0.0
  %165 = vmatpush1.msra.mxu0 %v15
  %166 = vmatprep.subr.mxu0 0.0
  %167 = vmatpush1.msra.mxu0 %v14
  %168 = vmatprep.subr.mxu0 0.0
  %169 = vmatpush2.msra.mxu0 0.0
  %170 = vmatprep.subr.mxu0 0.0
  %171 = vmatpush2.msra.mxu0 0.0
  %172 = vmatprep.subr.mxu0 0.0
  %173 = vmatpush2.msra.mxu0 0.0
  %174 = vmatprep.subr.mxu0 0.0
  %175 = vmatpush2.msra.mxu0 0.0
  %176 = vmatprep.subr.mxu0 0.0
  %177 = vmatpush2.msra.mxu0 0.0
  %178 = vmatprep.subr.mxu0 0.0
  %179 = vmatpush2.msra.mxu0 0.0
  %180 = vmatprep.subr.mxu0 0.0
  %181 = vmatpush2.msra.mxu0 0.0
  %182 = vmatprep.subr.mxu0 0.0
  %183 = vmatpush2.msra.mxu0 0.0
  %184 = vmatprep.subr.mxu0 0.0
  %185 = vmatpush2.msra.mxu0 0.0
  %186 = vmatprep.subr.mxu0 0.0
  %187 = vmatpush2.msra.mxu0 0.0
  %188 = vmatprep.subr.mxu0 0.0
  %189 = vmatpush2.msra.mxu0 0.0
  %190 = vmatprep.subr.mxu0 0.0
  %191 = vmatpush2.msra.mxu0 0.0
  %192 = vmatprep.subr.mxu0 0.0
  %193 = vmatpush2.msra.mxu0 0.0
  %194 = vmatprep.subr.mxu0 0.0
  %195 = vmatpush2.msra.mxu0 0.0
  %196 = vmatprep.subr.mxu0 0.0
  %197 = vmatpush2.msra.mxu0 0.0
  %198 = vmatprep.subr.mxu0 0.0
  %199 = vmatpush2.msra.mxu0 0.0
  %200 = vmatprep.mubr.f32.mxu0 0.0
  %201 = vmatmul.mubr.f32.gmra.mxu0 %v134
  %v202 = vpop.f32.mrf.mxu0
  %v203 = vadd.f32 %v131, %v202
  %v204 = vpop.f32.mrf.mxu0
  %205 = vdwg.mxu0
  %v206 = vmax.f32 %v203, 0.0
  %v208 = vsel %vm132, %v206, 0
  %210 = vmatprep.subr.mxu0 0.0
  %211 = vmatpush1.msra.mxu0 0.0
  %212 = vmatprep.subr.mxu0 0.0
  %213 = vmatpush1.msra.mxu0 0.0
  %214 = vmatprep.subr.mxu0 0.0
  %215 = vmatpush1.msra.mxu0 0.0
  %216 = vmatprep.subr.mxu0 0.0
  %217 = vmatpush1.msra.mxu0 0.0
  %218 = vmatprep.subr.mxu0 0.0
  %219 = vmatpush1.msra.mxu0 0.0
  %220 = vmatprep.subr.mxu0 0.0
  %221 = vmatpush1.msra.mxu0 0.0
  %222 = vmatprep.subr.mxu0 0.0
  %223 = vmatpush1.msra.mxu0 0.0
  %224 = vmatprep.subr.mxu0 0.0
  %225 = vmatpush1.msra.mxu0 0.0
  %226 = vmatprep.subr.mxu0 0.0
  %227 = vmatpush1.msra.mxu0 0.0
  %228 = vmatprep.subr.mxu0 0.0
  %229 = vmatpush1.msra.mxu0 0.0
  %230 = vmatprep.subr.mxu0 0.0
  %231 = vmatpush1.msra.mxu0 0.0
  %232 = vmatprep.subr.mxu0 0.0
  %233 = vmatpush1.msra.mxu0 0.0
  %234 = vmatprep.subr.mxu0 0.0
  %235 = vmatpush1.msra.mxu0 %v21
  %236 = vmatprep.subr.mxu0 0.0
  %237 = vmatpush1.msra.mxu0 %v20
  %238 = vmatprep.subr.mxu0 0.0
  %239 = vmatpush1.msra.mxu0 %v19
  %240 = vmatprep.subr.mxu0 0.0
  %241 = vmatpush1.msra.mxu0 %v18
  %242 = vmatprep.subr.mxu0 0.0
  %243 = vmatpush2.msra.mxu0 0.0
  %244 = vmatprep.subr.mxu0 0.0
  %245 = vmatpush2.msra.mxu0 0.0
  %246 = vmatprep.subr.mxu0 0.0
  %247 = vmatpush2.msra.mxu0 0.0
  %248 = vmatprep.subr.mxu0 0.0
  %249 = vmatpush2.msra.mxu0 0.0
  %250 = vmatprep.subr.mxu0 0.0
  %251 = vmatpush2.msra.mxu0 0.0
  %252 = vmatprep.subr.mxu0 0.0
  %253 = vmatpush2.msra.mxu0 0.0
  %254 = vmatprep.subr.mxu0 0.0
  %255 = vmatpush2.msra.mxu0 0.0
  %256 = vmatprep.subr.mxu0 0.0
  %257 = vmatpush2.msra.mxu0 0.0
  %258 = vmatprep.subr.mxu0 0.0
  %259 = vmatpush2.msra.mxu0 0.0
  %260 = vmatprep.subr.mxu0 0.0
  %261 = vmatpush2.msra.mxu0 0.0
  %262 = vmatprep.subr.mxu0 0.0
  %263 = vmatpush2.msra.mxu0 0.0
  %264 = vmatprep.subr.mxu0 0.0
  %265 = vmatpush2.msra.mxu0 0.0
  %266 = vmatprep.subr.mxu0 0.0
  %267 = vmatpush2.msra.mxu0 0.0
  %268 = vmatprep.subr.mxu0 0.0
  %269 = vmatpush2.msra.mxu0 0.0
  %270 = vmatprep.subr.mxu0 0.0
  %271 = vmatpush2.msra.mxu0 0.0
  %272 = vmatprep.subr.mxu0 0.0
  %273 = vmatpush2.msra.mxu0 0.0
  %274 = vmatprep.mubr.f32.mxu0 0.0
  %275 = vmatmul.mubr.f32.gmra.mxu0 %v208
  %v276 = vpop.f32.mrf.mxu0
  %v277 = vadd.f32 0.0, %v276
  %v278 = vpop.f32.mrf.mxu0
  %279 = vdwg.mxu0
  %v280 = vlaneseq
  %v281 = vshrl.u32 %v280, 7
  %v282 = vsub.s32 0, %v281
  %v283 = vrot.slane %v44, %v282
  %v285 = vsel %vm53, %v12, 0
  %287 = vmatprep.subr.mxu0 0.0
  %288 = vmatpush1.msra.mxu0 0.0
  %289 = vmatprep.subr.mxu0 0.0
  %290 = vmatpush1.msra.mxu0 0.0
  %291 = vmatprep.subr.mxu0 0.0
  %292 = vmatpush1.msra.mxu0 0.0
  %293 = vmatprep.subr.mxu0 0.0
  %294 = vmatpush1.msra.mxu0 0.0
  %295 = vmatprep.subr.mxu0 0.0
  %296 = vmatpush1.msra.mxu0 0.0
  %297 = vmatprep.subr.mxu0 0.0
  %298 = vmatpush1.msra.mxu0 0.0
  %299 = vmatprep.subr.mxu0 0.0
  %300 = vmatpush1.msra.mxu0 0.0
  %301 = vmatprep.subr.mxu0 0.0
  %302 = vmatpush1.msra.mxu0 0.0
  %303 = vmatprep.subr.mxu0 0.0
  %304 = vmatpush1.msra.mxu0 0.0
  %305 = vmatprep.subr.mxu0 0.0
  %306 = vmatpush1.msra.mxu0 0.0
  %307 = vmatprep.subr.mxu0 0.0
  %308 = vmatpush1.msra.mxu0 0.0
  %309 = vmatprep.subr.mxu0 0.0
  %310 = vmatpush1.msra.mxu0 0.0
  %311 = vmatprep.subr.mxu0 0.0
  %312 = vmatpush1.msra.mxu0 0.0
  %313 = vmatprep.subr.mxu0 0.0
  %314 = vmatpush1.msra.mxu0 0.0
  %315 = vmatprep.subr.mxu0 0.0
  %316 = vmatpush1.msra.mxu0 0.0
  %317 = vmatprep.subr.mxu0 0.0
  %318 = vmatpush1.msra.mxu0 %v277
  %319 = vmatprep.subr.mxu0 0.0
  %320 = vmatpush2.msra.mxu0 0.0
  %321 = vmatprep.subr.mxu0 0.0
  %322 = vmatpush2.msra.mxu0 0.0
  %323 = vmatprep.subr.mxu0 0.0
  %324 = vmatpush2.msra.mxu0 0.0
  %325 = vmatprep.subr.mxu0 0.0
  %326 = vmatpush2.msra.mxu0 0.0
  %327 = vmatprep.subr.mxu0 0.0
  %328 = vmatpush2.msra.mxu0 0.0
  %329 = vmatprep.subr.mxu0 0.0
  %330 = vmatpush2.msra.mxu0 0.0
  %331 = vmatprep.subr.mxu0 0.0
  %332 = vmatpush2.msra.mxu0 0.0
  %333 = vmatprep.subr.mxu0 0.0
  %334 = vmatpush2.msra.mxu0 0.0
  %335 = vmatprep.subr.mxu0 0.0
  %336 = vmatpush2.msra.mxu0 0.0
  %337 = vmatprep.subr.mxu0 0.0
  %338 = vmatpush2.msra.mxu0 0.0
  %339 = vmatprep.subr.mxu0 0.0
  %340 = vmatpush2.msra.mxu0 0.0
  %341 = vmatprep.subr.mxu0 0.0
  %342 = vmatpush2.msra.mxu0 0.0
  %343 = vmatprep.subr.mxu0 0.0
  %344 = vmatpush2.msra.mxu0 0.0
  %345 = vmatprep.subr.mxu0 0.0
  %346 = vmatpush2.msra.mxu0 0.0
  %347 = vmatprep.subr.mxu0 0.0
  %348 = vmatpush2.msra.mxu0 0.0
  %349 = vmatprep.subr.mxu0 0.0
  %350 = vmatpush2.msra.mxu0 0.0
  %351 = vmatprep.mubr.f32.mxu0 0.0
  %352 = vmatmul.mubr.f32.gmra.mxu0 %v285
  %v353 = vpop.f32.mrf.mxu0
  %v354 = vadd.f32 %v283, %v353
  %v355 = vpop.f32.mrf.mxu0
  %356 = vdwg.mxu0
  %v357 = vmax.f32 %v354, 0.0
  %v358 = vlaneseq
  %v359 = vshrl.u32 %v358, 7
  %v360 = vsub.s32 0, %v359
  %v361 = vrot.slane %v45, %v360
  %v363 = vsel %vm132, %v357, 0
  %365 = vmatprep.subr.mxu0 0.0
  %366 = vmatpush1.msra.mxu0 0.0
  %367 = vmatprep.subr.mxu0 0.0
  %368 = vmatpush1.msra.mxu0 0.0
  %369 = vmatprep.subr.mxu0 0.0
  %370 = vmatpush1.msra.mxu0 0.0
  %371 = vmatprep.subr.mxu0 0.0
  %372 = vmatpush1.msra.mxu0 0.0
  %373 = vmatprep.subr.mxu0 0.0
  %374 = vmatpush1.msra.mxu0 0.0
  %375 = vmatprep.subr.mxu0 0.0
  %376 = vmatpush1.msra.mxu0 0.0
  %377 = vmatprep.subr.mxu0 0.0
  %378 = vmatpush1.msra.mxu0 0.0
  %379 = vmatprep.subr.mxu0 0.0
  %380 = vmatpush1.msra.mxu0 0.0
  %381 = vmatprep.subr.mxu0 0.0
  %382 = vmatpush1.msra.mxu0 0.0
  %383 = vmatprep.subr.mxu0 0.0
  %384 = vmatpush1.msra.mxu0 0.0
  %385 = vmatprep.subr.mxu0 0.0
  %386 = vmatpush1.msra.mxu0 0.0
  %387 = vmatprep.subr.mxu0 0.0
  %388 = vmatpush1.msra.mxu0 0.0
  %389 = vmatprep.subr.mxu0 0.0
  %390 = vmatpush1.msra.mxu0 %v25
  %391 = vmatprep.subr.mxu0 0.0
  %392 = vmatpush1.msra.mxu0 %v24
  %393 = vmatprep.subr.mxu0 0.0
  %394 = vmatpush1.msra.mxu0 %v23
  %395 = vmatprep.subr.mxu0 0.0
  %396 = vmatpush1.msra.mxu0 %v22
  %397 = vmatprep.subr.mxu0 0.0
  %398 = vmatpush2.msra.mxu0 0.0
  %399 = vmatprep.subr.mxu0 0.0
  %400 = vmatpush2.msra.mxu0 0.0
  %401 = vmatprep.subr.mxu0 0.0
  %402 = vmatpush2.msra.mxu0 0.0
  %403 = vmatprep.subr.mxu0 0.0
  %404 = vmatpush2.msra.mxu0 0.0
  %405 = vmatprep.subr.mxu0 0.0
  %406 = vmatpush2.msra.mxu0 0.0
  %407 = vmatprep.subr.mxu0 0.0
  %408 = vmatpush2.msra.mxu0 0.0
  %409 = vmatprep.subr.mxu0 0.0
  %410 = vmatpush2.msra.mxu0 0.0
  %411 = vmatprep.subr.mxu0 0.0
  %412 = vmatpush2.msra.mxu0 0.0
  %413 = vmatprep.subr.mxu0 0.0
  %414 = vmatpush2.msra.mxu0 0.0
  %415 = vmatprep.subr.mxu0 0.0
  %416 = vmatpush2.msra.mxu0 0.0
  %417 = vmatprep.subr.mxu0 0.0
  %418 = vmatpush2.msra.mxu0 0.0
  %419 = vmatprep.subr.mxu0 0.0
  %420 = vmatpush2.msra.mxu0 0.0
  %421 = vmatprep.subr.mxu0 0.0
  %422 = vmatpush2.msra.mxu0 0.0
  %423 = vmatprep.subr.mxu0 0.0
  %424 = vmatpush2.msra.mxu0 0.0
  %425 = vmatprep.subr.mxu0 0.0
  %426 = vmatpush2.msra.mxu0 0.0
  %427 = vmatprep.subr.mxu0 0.0
  %428 = vmatpush2.msra.mxu0 0.0
  %429 = vmatprep.mubr.f32.mxu0 0.0
  %430 = vmatmul.mubr.f32.gmra.mxu0 %v363
  %v431 = vpop.f32.mrf.mxu0
  %v432 = vadd.f32 %v361, %v431
  %v433 = vpop.f32.mrf.mxu0
  %434 = vdwg.mxu0
  %v435 = vmax.f32 %v432, 0.0
  %436 = vmatprep.subr.mxu0 0.0
  %437 = vmatpush1.msra.mxu0 0.0
  %438 = vmatprep.subr.mxu0 0.0
  %439 = vmatpush1.msra.mxu0 0.0
  %440 = vmatprep.subr.mxu0 0.0
  %441 = vmatpush1.msra.mxu0 0.0
  %442 = vmatprep.subr.mxu0 0.0
  %443 = vmatpush1.msra.mxu0 0.0
  %444 = vmatprep.subr.mxu0 0.0
  %445 = vmatpush1.msra.mxu0 0.0
  %446 = vmatprep.subr.mxu0 0.0
  %447 = vmatpush1.msra.mxu0 0.0
  %448 = vmatprep.subr.mxu0 0.0
  %449 = vmatpush1.msra.mxu0 0.0
  %450 = vmatprep.subr.mxu0 0.0
  %451 = vmatpush1.msra.mxu0 0.0
  %452 = vmatprep.subr.mxu0 0.0
  %453 = vmatpush1.msra.mxu0 0.0
  %454 = vmatprep.subr.mxu0 0.0
  %455 = vmatpush1.msra.mxu0 0.0
  %456 = vmatprep.subr.mxu0 0.0
  %457 = vmatpush1.msra.mxu0 0.0
  %458 = vmatprep.subr.mxu0 0.0
  %459 = vmatpush1.msra.mxu0 0.0
  %460 = vmatprep.subr.mxu0 0.0
  %461 = vmatpush1.msra.mxu0 %v33
  %462 = vmatprep.subr.mxu0 0.0
  %463 = vmatpush1.msra.mxu0 %v32
  %464 = vmatprep.subr.mxu0 0.0
  %465 = vmatpush1.msra.mxu0 %v31
  %466 = vmatprep.subr.mxu0 0.0
  %467 = vmatpush1.msra.mxu0 %v30
  %468 = vmatprep.subr.mxu0 0.0
  %469 = vmatpush2.msra.mxu0 0.0
  %470 = vmatprep.subr.mxu0 0.0
  %471 = vmatpush2.msra.mxu0 0.0
  %472 = vmatprep.subr.mxu0 0.0
  %473 = vmatpush2.msra.mxu0 0.0
  %474 = vmatprep.subr.mxu0 0.0
  %475 = vmatpush2.msra.mxu0 0.0
  %476 = vmatprep.subr.mxu0 0.0
  %477 = vmatpush2.msra.mxu0 0.0
  %478 = vmatprep.subr.mxu0 0.0
  %479 = vmatpush2.msra.mxu0 0.0
  %480 = vmatprep.subr.mxu0 0.0
  %481 = vmatpush2.msra.mxu0 0.0
  %482 = vmatprep.subr.mxu0 0.0
  %483 = vmatpush2.msra.mxu0 0.0
  %484 = vmatprep.subr.mxu0 0.0
  %485 = vmatpush2.msra.mxu0 0.0
  %486 = vmatprep.subr.mxu0 0.0
  %487 = vmatpush2.msra.mxu0 0.0
  %488 = vmatprep.subr.mxu0 0.0
  %489 = vmatpush2.msra.mxu0 0.0
  %490 = vmatprep.subr.mxu0 0.0
  %491 = vmatpush2.msra.mxu0 0.0
  %492 = vmatprep.subr.mxu0 0.0
  %493 = vmatpush2.msra.mxu0 0.0
  %494 = vmatprep.subr.mxu0 0.0
  %495 = vmatpush2.msra.mxu0 0.0
  %496 = vmatprep.subr.mxu0 0.0
  %497 = vmatpush2.msra.mxu0 0.0
  %498 = vmatprep.subr.mxu0 0.0
  %499 = vmatpush2.msra.mxu0 0.0
  %500 = vmatprep.mubr.f32.mxu0 0.0
  %501 = vmatmul.mubr.f32.gmra.mxu0 %v208
  %v502 = vpop.f32.mrf.mxu0
  %v503 = vadd.f32 0.0, %v502
  %v504 = vpop.f32.mrf.mxu0
  %505 = vdwg.mxu0
  %v507 = vsel %vm132, %v435, 0
  %509 = vmatprep.subr.mxu0 0.0
  %510 = vmatpush1.msra.mxu0 0.0
  %511 = vmatprep.subr.mxu0 0.0
  %512 = vmatpush1.msra.mxu0 0.0
  %513 = vmatprep.subr.mxu0 0.0
  %514 = vmatpush1.msra.mxu0 0.0
  %515 = vmatprep.subr.mxu0 0.0
  %516 = vmatpush1.msra.mxu0 0.0
  %517 = vmatprep.subr.mxu0 0.0
  %518 = vmatpush1.msra.mxu0 0.0
  %519 = vmatprep.subr.mxu0 0.0
  %520 = vmatpush1.msra.mxu0 0.0
  %521 = vmatprep.subr.mxu0 0.0
  %522 = vmatpush1.msra.mxu0 0.0
  %523 = vmatprep.subr.mxu0 0.0
  %524 = vmatpush1.msra.mxu0 0.0
  %525 = vmatprep.subr.mxu0 0.0
  %526 = vmatpush1.msra.mxu0 0.0
  %527 = vmatprep.subr.mxu0 0.0
  %528 = vmatpush1.msra.mxu0 0.0
  %529 = vmatprep.subr.mxu0 0.0
  %530 = vmatpush1.msra.mxu0 0.0
  %531 = vmatprep.subr.mxu0 0.0
  %532 = vmatpush1.msra.mxu0 0.0
  %533 = vmatprep.subr.mxu0 0.0
  %534 = vmatpush1.msra.mxu0 %v29
  %535 = vmatprep.subr.mxu0 0.0
  %536 = vmatpush1.msra.mxu0 %v28
  %537 = vmatprep.subr.mxu0 0.0
  %538 = vmatpush1.msra.mxu0 %v27
  %539 = vmatprep.subr.mxu0 0.0
  %540 = vmatpush1.msra.mxu0 %v26
  %541 = vmatprep.subr.mxu0 0.0
  %542 = vmatpush2.msra.mxu0 0.0
  %543 = vmatprep.subr.mxu0 0.0
  %544 = vmatpush2.msra.mxu0 0.0
  %545 = vmatprep.subr.mxu0 0.0
  %546 = vmatpush2.msra.mxu0 0.0
  %547 = vmatprep.subr.mxu0 0.0
  %548 = vmatpush2.msra.mxu0 0.0
  %549 = vmatprep.subr.mxu0 0.0
  %550 = vmatpush2.msra.mxu0 0.0
  %551 = vmatprep.subr.mxu0 0.0
  %552 = vmatpush2.msra.mxu0 0.0
  %553 = vmatprep.subr.mxu0 0.0
  %554 = vmatpush2.msra.mxu0 0.0
  %555 = vmatprep.subr.mxu0 0.0
  %556 = vmatpush2.msra.mxu0 0.0
  %557 = vmatprep.subr.mxu0 0.0
  %558 = vmatpush2.msra.mxu0 0.0
  %559 = vmatprep.subr.mxu0 0.0
  %560 = vmatpush2.msra.mxu0 0.0
  %561 = vmatprep.subr.mxu0 0.0
  %562 = vmatpush2.msra.mxu0 0.0
  %563 = vmatprep.subr.mxu0 0.0
  %564 = vmatpush2.msra.mxu0 0.0
  %565 = vmatprep.subr.mxu0 0.0
  %566 = vmatpush2.msra.mxu0 0.0
  %567 = vmatprep.subr.mxu0 0.0
  %568 = vmatpush2.msra.mxu0 0.0
  %569 = vmatprep.subr.mxu0 0.0
  %570 = vmatpush2.msra.mxu0 0.0
  %571 = vmatprep.subr.mxu0 0.0
  %572 = vmatpush2.msra.mxu0 0.0
  %573 = vmatprep.mubr.f32.mxu0 0.0
  %574 = vmatmul.mubr.f32.gmra.mxu0 %v507
  %v575 = vpop.f32.mrf.mxu0
  %v576 = vadd.f32 %v503, %v575
  %v577 = vpop.f32.mrf.mxu0
  %578 = vdwg.mxu0
  %v579 = vlaneseq
  %v580 = vshrl.u32 %v579, 7
  %v581 = vsub.s32 0, %v580
  %v582 = vrot.slane %v46, %v581
  %v583 = vadd.f32 %v576, %v582
  %v584 = vmax.f32 %v583, 0.0
  %v585 = vlaneseq
  %v586 = vshrl.u32 %v585, 7
  %v587 = vsub.s32 0, %v586
  %v588 = vrot.slane %v47, %v587
  %v590 = vsel %vm132, %v584, 0
  %592 = vmatprep.subr.mxu0 0.0
  %593 = vmatpush1.msra.mxu0 0.0
  %594 = vmatprep.subr.mxu0 0.0
  %595 = vmatpush1.msra.mxu0 0.0
  %596 = vmatprep.subr.mxu0 0.0
  %597 = vmatpush1.msra.mxu0 0.0
  %598 = vmatprep.subr.mxu0 0.0
  %599 = vmatpush1.msra.mxu0 0.0
  %600 = vmatprep.subr.mxu0 0.0
  %601 = vmatpush1.msra.mxu0 0.0
  %602 = vmatprep.subr.mxu0 0.0
  %603 = vmatpush1.msra.mxu0 0.0
  %604 = vmatprep.subr.mxu0 0.0
  %605 = vmatpush1.msra.mxu0 0.0
  %606 = vmatprep.subr.mxu0 0.0
  %607 = vmatpush1.msra.mxu0 0.0
  %608 = vmatprep.subr.mxu0 0.0
  %609 = vmatpush1.msra.mxu0 0.0
  %610 = vmatprep.subr.mxu0 0.0
  %611 = vmatpush1.msra.mxu0 0.0
  %612 = vmatprep.subr.mxu0 0.0
  %613 = vmatpush1.msra.mxu0 0.0
  %614 = vmatprep.subr.mxu0 0.0
  %615 = vmatpush1.msra.mxu0 0.0
  %616 = vmatprep.subr.mxu0 0.0
  %617 = vmatpush1.msra.mxu0 %v37
  %618 = vmatprep.subr.mxu0 0.0
  %619 = vmatpush1.msra.mxu0 %v36
  %620 = vmatprep.subr.mxu0 0.0
  %621 = vmatpush1.msra.mxu0 %v35
  %622 = vmatprep.subr.mxu0 0.0
  %623 = vmatpush1.msra.mxu0 %v34
  %624 = vmatprep.subr.mxu0 0.0
  %625 = vmatpush2.msra.mxu0 0.0
  %626 = vmatprep.subr.mxu0 0.0
  %627 = vmatpush2.msra.mxu0 0.0
  %628 = vmatprep.subr.mxu0 0.0
  %629 = vmatpush2.msra.mxu0 0.0
  %630 = vmatprep.subr.mxu0 0.0
  %631 = vmatpush2.msra.mxu0 0.0
  %632 = vmatprep.subr.mxu0 0.0
  %633 = vmatpush2.msra.mxu0 0.0
  %634 = vmatprep.subr.mxu0 0.0
  %635 = vmatpush2.msra.mxu0 0.0
  %636 = vmatprep.subr.mxu0 0.0
  %637 = vmatpush2.msra.mxu0 0.0
  %638 = vmatprep.subr.mxu0 0.0
  %639 = vmatpush2.msra.mxu0 0.0
  %640 = vmatprep.subr.mxu0 0.0
  %641 = vmatpush2.msra.mxu0 0.0
  %642 = vmatprep.subr.mxu0 0.0
  %643 = vmatpush2.msra.mxu0 0.0
  %644 = vmatprep.subr.mxu0 0.0
  %645 = vmatpush2.msra.mxu0 0.0
  %646 = vmatprep.subr.mxu0 0.0
  %647 = vmatpush2.msra.mxu0 0.0
  %648 = vmatprep.subr.mxu0 0.0
  %649 = vmatpush2.msra.mxu0 0.0
  %650 = vmatprep.subr.mxu0 0.0
  %651 = vmatpush2.msra.mxu0 0.0
  %652 = vmatprep.subr.mxu0 0.0
  %653 = vmatpush2.msra.mxu0 0.0
  %654 = vmatprep.subr.mxu0 0.0
  %655 = vmatpush2.msra.mxu0 0.0
  %656 = vmatprep.mubr.f32.mxu0 0.0
  %657 = vmatmul.mubr.f32.gmra.mxu0 %v590
  %v658 = vpop.f32.mrf.mxu0
  %v659 = vadd.f32 %v588, %v658
  %v660 = vpop.f32.mrf.mxu0
  %661 = vdwg.mxu0
  %v662 = vmax.f32 %v659, 0.0
  %v663 = vlaneseq
  %v664 = vshrl.u32 %v663, 7
  %v665 = vsub.s32 0, %v664
  %v666 = vrot.slane %v48, %v665
  %v668 = vsel %vm132, %v662, 0
  %670 = vmatprep.subr.mxu0 0.0
  %671 = vmatpush1.msra.mxu0 0.0
  %672 = vmatprep.subr.mxu0 0.0
  %673 = vmatpush1.msra.mxu0 0.0
  %674 = vmatprep.subr.mxu0 0.0
  %675 = vmatpush1.msra.mxu0 0.0
  %676 = vmatprep.subr.mxu0 0.0
  %677 = vmatpush1.msra.mxu0 0.0
  %678 = vmatprep.subr.mxu0 0.0
  %679 = vmatpush1.msra.mxu0 0.0
  %680 = vmatprep.subr.mxu0 0.0
  %681 = vmatpush1.msra.mxu0 0.0
  %682 = vmatprep.subr.mxu0 0.0
  %683 = vmatpush1.msra.mxu0 0.0
  %684 = vmatprep.subr.mxu0 0.0
  %685 = vmatpush1.msra.mxu0 0.0
  %686 = vmatprep.subr.mxu0 0.0
  %687 = vmatpush1.msra.mxu0 0.0
  %688 = vmatprep.subr.mxu0 0.0
  %689 = vmatpush1.msra.mxu0 0.0
  %690 = vmatprep.subr.mxu0 0.0
  %691 = vmatpush1.msra.mxu0 0.0
  %692 = vmatprep.subr.mxu0 0.0
  %693 = vmatpush1.msra.mxu0 0.0
  %694 = vmatprep.subr.mxu0 0.0
  %695 = vmatpush1.msra.mxu0 %v41
  %696 = vmatprep.subr.mxu0 0.0
  %697 = vmatpush1.msra.mxu0 %v40
  %698 = vmatprep.subr.mxu0 0.0
  %699 = vmatpush1.msra.mxu0 %v39
  %700 = vmatprep.subr.mxu0 0.0
  %701 = vmatpush1.msra.mxu0 %v38
  %702 = vmatprep.subr.mxu0 0.0
  %703 = vmatpush2.msra.mxu0 0.0
  %704 = vmatprep.subr.mxu0 0.0
  %705 = vmatpush2.msra.mxu0 0.0
  %706 = vmatprep.subr.mxu0 0.0
  %707 = vmatpush2.msra.mxu0 0.0
  %708 = vmatprep.subr.mxu0 0.0
  %709 = vmatpush2.msra.mxu0 0.0
  %710 = vmatprep.subr.mxu0 0.0
  %711 = vmatpush2.msra.mxu0 0.0
  %712 = vmatprep.subr.mxu0 0.0
  %713 = vmatpush2.msra.mxu0 0.0
  %714 = vmatprep.subr.mxu0 0.0
  %715 = vmatpush2.msra.mxu0 0.0
  %716 = vmatprep.subr.mxu0 0.0
  %717 = vmatpush2.msra.mxu0 0.0
  %718 = vmatprep.subr.mxu0 0.0
  %719 = vmatpush2.msra.mxu0 0.0
  %720 = vmatprep.subr.mxu0 0.0
  %721 = vmatpush2.msra.mxu0 0.0
  %722 = vmatprep.subr.mxu0 0.0
  %723 = vmatpush2.msra.mxu0 0.0
  %724 = vmatprep.subr.mxu0 0.0
  %725 = vmatpush2.msra.mxu0 0.0
  %726 = vmatprep.subr.mxu0 0.0
  %727 = vmatpush2.msra.mxu0 0.0
  %728 = vmatprep.subr.mxu0 0.0
  %729 = vmatpush2.msra.mxu0 0.0
  %730 = vmatprep.subr.mxu0 0.0
  %731 = vmatpush2.msra.mxu0 0.0
  %732 = vmatprep.subr.mxu0 0.0
  %733 = vmatpush2.msra.mxu0 0.0
  %734 = vmatprep.mubr.f32.mxu0 0.0
  %735 = vmatmul.mubr.f32.gmra.mxu0 %v668
  %v736 = vpop.f32.mrf.mxu0
  %v737 = vadd.f32 %v666, %v736
  %v738 = vpop.f32.mrf.mxu0
  %739 = vdwg.mxu0
  %v740 = vtanh.pop %v737
  %v741 = vmul.f32 %v740, 1.5
  %v742 = vadd.f32 %v741, -0.5
  %v743 = vsel %vm132, %v742, 0.0
  %744 = vst [vmem:[%s2] sm:$0xff] %v743
  // Predicated region
  $region10: #{graph_actor_forward.1} parent=0 // pred_check
    _
  $region11: #{graph_actor_forward.1} parent=0 // pred_check_branch
    %746 = sbr.rel (0) target = $region13
  $region12: #{graph_actor_forward.1} parent=0 // pred_region
    _
  $region13: #{graph_actor_forward.1} parent=0 // pred_fallthru
    _
  // Predicated region
  $region14: #{graph_actor_forward.1} parent=0 // pred_check
    _
  $region15: #{graph_actor_forward.1} parent=0 // pred_check_branch
    %748 = sbr.rel (0) target = $region17
  $region16: #{graph_actor_forward.1} parent=0 // pred_region
    _
  $region17: #{graph_actor_forward.1} parent=0 // pred_fallthru
    _

</llo_original>
